<compile_context>
chip_gen: v5e
topology: v5e:2x2
jax: 0.10.0
libtpu: 0.0.40
codegen_flags: <defaults>
</compile_context>

<pallas_src>
import functools

import jax
import jax.numpy as jnp
from jax.experimental import pallas as pl
from jax.experimental.pallas import tpu as pltpu

NEG_SLOPE = 0.01  # nn.LeakyReLU() default

LANE = 128        # lane width: hidden dim padded to a multiple of this (weights only)
SUBLANE = 8       # sublane width: batch tile must be a multiple of this
TILE_B_MAX = 2048  # batch tile cap; ~3-6 MiB VMEM at these widths, well under limits


def _round_up(x, m):
    return (x + m - 1) // m * m


def _cdiv(a, b):
    return -(-a // b)


def _leaky_relu(x):
    return jnp.where(x >= 0, x, NEG_SLOPE * x)


def mlp_kernel(x_ref, w1_ref, b1_ref, w2_ref, b2_ref, w3_ref, b3_ref, o_ref):
    # One batch tile per grid step; weights/biases are VMEM-resident across steps
    # (constant index_maps). All three matmuls + bias adds + LeakyReLUs fused.
    # Operand cast (no-op in f32 mode) happens in-kernel on the VPU, accumulation
    # is always f32, biases are always f32.
    x = x_ref[...].astype(w1_ref.dtype)
    h1 = jnp.dot(x, w1_ref[...], preferred_element_type=jnp.float32) + b1_ref[...]
    h1 = _leaky_relu(h1).astype(w2_ref.dtype)
    h2 = jnp.dot(h1, w2_ref[...], preferred_element_type=jnp.float32) + b2_ref[...]
    h2 = _leaky_relu(h2).astype(w3_ref.dtype)
    o_ref[...] = (
        jnp.dot(h2, w3_ref[...], preferred_element_type=jnp.float32) + b3_ref[...]
    ).astype(o_ref.dtype)


def prepare_params(params, compute_dtype=jnp.float32):
    """One-time (outside the forward) weight prep.

    Pads the hidden dim up to the 128-lane width with zeros (semantics-preserving:
    padded weight cols/rows and biases are 0, LeakyReLU(0)=0) and casts weights to
    the compute dtype. Biases stay float32 (added to the f32 accumulator).
    Input/output feature dims are NOT padded (full-dim blocks handle them).
    """
    num_inputs = params["w1"].shape[0]
    num_hidden = params["w1"].shape[1]
    num_outputs = params["w3"].shape[1]
    h_p = _round_up(num_hidden, LANE)

    def pad2(a, r, c, dt):
        return jnp.pad(a, ((0, r - a.shape[0]), (0, c - a.shape[1]))).astype(dt)

    return {
        "w1": pad2(params["w1"], num_inputs, h_p, compute_dtype),
        "b1": pad2(params["b1"], 1, h_p, jnp.float32),
        "w2": pad2(params["w2"], h_p, h_p, compute_dtype),
        "b2": pad2(params["b2"], 1, h_p, jnp.float32),
        "w3": pad2(params["w3"], h_p, num_outputs, compute_dtype),
        "b3": pad2(params["b3"], 1, num_outputs, jnp.float32),
    }


@jax.jit
def simple_classifier_forward(x, padded_params):
    """x: (B, num_inputs). padded_params: output of prepare_params().

    Fused 3-layer MLP over a batch-tiled grid. x and the output are unpadded in
    the lane dim (only their batch dim is rounded up to the tile size); weights
    stay VMEM-resident across grid steps.
    """
    B, num_inputs = x.shape
    w1, b1 = padded_params["w1"], padded_params["b1"]
    w2, b2 = padded_params["w2"], padded_params["b2"]
    w3, b3 = padded_params["w3"], padded_params["b3"]
    h_p = w1.shape[1]
    num_outputs = w3.shape[1]

    # Adaptive batch tiling: near-equal tiles (bounds round-up waste to <8 rows),
    # >=2 grid steps whenever possible so v7x megacore sharding has work to split.
    b_sub = _round_up(B, SUBLANE)
    num_tiles = max(2, _cdiv(b_sub, TILE_B_MAX)) if b_sub > SUBLANE else 1
    tile_b = _round_up(_cdiv(b_sub, num_tiles), SUBLANE)
    b_p = _round_up(b_sub, tile_b)
    grid = (b_p // tile_b,)

    # Only batch-pad x (zero rows); never lane-pad it in HBM.
    x_p = x if b_p == B else jnp.pad(x, ((0, b_p - B), (0, 0)))

    w_itemsize = jnp.dtype(w1.dtype).itemsize
    x_itemsize = jnp.dtype(x.dtype).itemsize
    flops = 2 * b_p * (num_inputs * h_p + h_p * h_p + h_p * num_outputs)
    bytes_accessed = (
        b_p * num_inputs * x_itemsize                                    # x
        + (num_inputs * h_p + h_p * h_p + h_p * num_outputs) * w_itemsize  # weights
        + (2 * h_p + num_outputs) * 4                                    # biases (f32)
        + b_p * num_outputs * 4                                          # out (f32)
    )

    # Weights/biases: constant index_map -> one DMA, VMEM-resident across batch tiles.
    const = lambda a: pl.BlockSpec(a.shape, lambda i: (0, 0))

    out_p = pl.pallas_call(
        mlp_kernel,
        out_shape=jax.ShapeDtypeStruct((b_p, num_outputs), jnp.float32),
        grid=grid,
        in_specs=[
            # Full-array last dims (<128) are legal block shapes; lane padding of x
            # happens only inside vregs, never in HBM.
            pl.BlockSpec((tile_b, num_inputs), lambda i: (i, 0)),
            const(w1), const(b1),
            const(w2), const(b2),
            const(w3), const(b3),
        ],
        out_specs=pl.BlockSpec((tile_b, num_outputs), lambda i: (i, 0)),
        compiler_params=pltpu.CompilerParams(
            dimension_semantics=("parallel",),  # batch tiles shard across v7x's 2 TCs
        ),
        cost_estimate=pl.CostEstimate(
            flops=flops, transcendentals=0, bytes_accessed=bytes_accessed
        ),
    )(x_p, w1, b1, w2, b2, w3, b3)

    return out_p[:B] if b_p != B else out_p


def init_params(key, num_inputs, num_hidden, num_outputs):
    """Deterministic synthetic init (uniform, same fan-in scaling as PyTorch default)."""
    ks = jax.random.split(key, 6)

    def lin(kw, kb, fan_in, fan_out):
        bound = 1.0 / jnp.sqrt(fan_in)
        w = jax.random.uniform(kw, (fan_in, fan_out), jnp.float32, -bound, bound)
        b = jax.random.uniform(kb, (1, fan_out), jnp.float32, -bound, bound)
        return w, b

    w1, b1 = lin(ks[0], ks[1], num_inputs, num_hidden)
    w2, b2 = lin(ks[2], ks[3], num_hidden, num_hidden)
    w3, b3 = lin(ks[4], ks[5], num_hidden, num_outputs)
    return {"w1": w1, "b1": b1, "w2": w2, "b2": b2, "w3": w3, "b3": b3}


def reference_forward(x, p):
    h1 = _leaky_relu(x @ p["w1"] + p["b1"])
    h2 = _leaky_relu(h1 @ p["w2"] + p["b2"])
    return h2 @ p["w3"] + p["b3"]


if __name__ == "__main__":
    num_inputs, num_hidden, num_outputs = 32, 32, 8

    key = jax.random.PRNGKey(0)
    kx, kp = jax.random.split(key)
    params = init_params(kp, num_inputs, num_hidden, num_outputs)
    padded_params = prepare_params(params)  # once, outside the forward

    # Small batch (single-tile path).
    x = jax.random.normal(kx, (8, num_inputs), jnp.float32)
    out = jax.block_until_ready(simple_classifier_forward(x, padded_params))
    ref = reference_forward(x, params)
    assert out.shape == (8, num_outputs), out.shape
    assert jnp.allclose(out, ref, atol=1e-5, rtol=1e-5), "mismatch vs reference (B=8)"

    # Non-tile-aligned batch: exercises adaptive tiling, multi-step grid,
    # batch padding and output slicing.
    x2 = jax.random.normal(kx, (300, num_inputs), jnp.float32)
    out2 = jax.block_until_ready(simple_classifier_forward(x2, padded_params))
    ref2 = reference_forward(x2, params)
    assert out2.shape == (300, num_outputs), out2.shape
    assert jnp.allclose(out2, ref2, atol=1e-5, rtol=1e-5), "mismatch vs reference (B=300)"

    print("KERNEL_OK")
</pallas_src>

<mosaic_0001>
module attributes {stable_mosaic.version = 11 : i64} {
  func.func @mlp_kernel(%arg0: i32, %arg1: memref<8x32xf32, #tpu.memory_space<vmem>>, %arg2: memref<32x128xf32, #tpu.memory_space<vmem>>, %arg3: memref<1x128xf32, #tpu.memory_space<vmem>>, %arg4: memref<128x128xf32, #tpu.memory_space<vmem>>, %arg5: memref<1x128xf32, #tpu.memory_space<vmem>>, %arg6: memref<128x8xf32, #tpu.memory_space<vmem>>, %arg7: memref<1x8xf32, #tpu.memory_space<vmem>>, %arg8: memref<8x8xf32, #tpu.memory_space<vmem>>) attributes {dimension_semantics = [#tpu.dimension_semantics<parallel>], iteration_bounds = array<i64: 1>, scalar_prefetch = 0 : i64, scratch_operands = 0 : i64, tpu.core_type = #tpu.core_type<tc>, window_params = [{transform_indices = @transform_0, window_bounds = array<i64: 8, 32>}, {pipeline_mode = #tpu.pipeline_mode<synchronous>, transform_indices = @transform_1, window_bounds = array<i64: 32, 128>}, {pipeline_mode = #tpu.pipeline_mode<synchronous>, transform_indices = @transform_2, window_bounds = array<i64: 1, 128>}, {pipeline_mode = #tpu.pipeline_mode<synchronous>, transform_indices = @transform_3, window_bounds = array<i64: 128, 128>}, {pipeline_mode = #tpu.pipeline_mode<synchronous>, transform_indices = @transform_4, window_bounds = array<i64: 1, 128>}, {pipeline_mode = #tpu.pipeline_mode<synchronous>, transform_indices = @transform_5, window_bounds = array<i64: 128, 8>}, {pipeline_mode = #tpu.pipeline_mode<synchronous>, transform_indices = @transform_6, window_bounds = array<i64: 1, 8>}, {transform_indices = @transform_7, window_bounds = array<i64: 8, 8>}]} {
    %c0 = arith.constant 0 : index
    %c0_0 = arith.constant 0 : index
    %0 = vector.load %arg1[%c0, %c0_0] : memref<8x32xf32, #tpu.memory_space<vmem>>, vector<8x32xf32>
    %c0_1 = arith.constant 0 : index
    %c0_2 = arith.constant 0 : index
    %1 = vector.load %arg2[%c0_1, %c0_2] : memref<32x128xf32, #tpu.memory_space<vmem>>, vector<32x128xf32>
    %cst = arith.constant dense<0.000000e+00> : vector<8x128xf32>
    %2 = tpu.matmul %0, %1, %cst {dimension_numbers = #tpu.dot_dimension_numbers<[1], [0], [0], [1], [0, 0, 1, 1], [], []>} : vector<8x32xf32>, vector<32x128xf32>, vector<8x128xf32> -> vector<8x128xf32>
    %c0_3 = arith.constant 0 : index
    %c0_4 = arith.constant 0 : index
    %3 = vector.load %arg3[%c0_3, %c0_4] : memref<1x128xf32, #tpu.memory_space<vmem>>, vector<1x128xf32>
    %4 = vector.broadcast %3 : vector<1x128xf32> to vector<8x128xf32>
    %5 = arith.addf %2, %4 : vector<8x128xf32>
    %cst_5 = arith.constant 0.000000e+00 : f32
    %6 = vector.broadcast %cst_5 : f32 to vector<8x128xf32>
    %7 = arith.cmpf oge, %5, %6 : vector<8x128xf32>
    %cst_6 = arith.constant 0.00999999977 : f32
    %8 = vector.broadcast %cst_6 : f32 to vector<8x128xf32>
    %9 = arith.mulf %8, %5 : vector<8x128xf32>
    %10 = arith.select %7, %5, %9 : vector<8x128xi1>, vector<8x128xf32>
    %c0_7 = arith.constant 0 : index
    %c0_8 = arith.constant 0 : index
    %11 = vector.load %arg4[%c0_7, %c0_8] : memref<128x128xf32, #tpu.memory_space<vmem>>, vector<128x128xf32>
    %cst_9 = arith.constant dense<0.000000e+00> : vector<8x128xf32>
    %12 = tpu.matmul %10, %11, %cst_9 {dimension_numbers = #tpu.dot_dimension_numbers<[1], [0], [0], [1], [0, 0, 1, 1], [], []>} : vector<8x128xf32>, vector<128x128xf32>, vector<8x128xf32> -> vector<8x128xf32>
    %c0_10 = arith.constant 0 : index
    %c0_11 = arith.constant 0 : index
    %13 = vector.load %arg5[%c0_10, %c0_11] : memref<1x128xf32, #tpu.memory_space<vmem>>, vector<1x128xf32>
    %14 = vector.broadcast %13 : vector<1x128xf32> to vector<8x128xf32>
    %15 = arith.addf %12, %14 : vector<8x128xf32>
    %cst_12 = arith.constant 0.000000e+00 : f32
    %16 = vector.broadcast %cst_12 : f32 to vector<8x128xf32>
    %17 = arith.cmpf oge, %15, %16 : vector<8x128xf32>
    %cst_13 = arith.constant 0.00999999977 : f32
    %18 = vector.broadcast %cst_13 : f32 to vector<8x128xf32>
    %19 = arith.mulf %18, %15 : vector<8x128xf32>
    %20 = arith.select %17, %15, %19 : vector<8x128xi1>, vector<8x128xf32>
    %c0_14 = arith.constant 0 : index
    %c0_15 = arith.constant 0 : index
    %21 = vector.load %arg6[%c0_14, %c0_15] : memref<128x8xf32, #tpu.memory_space<vmem>>, vector<128x8xf32>
    %cst_16 = arith.constant dense<0.000000e+00> : vector<8x8xf32>
    %22 = tpu.matmul %20, %21, %cst_16 {dimension_numbers = #tpu.dot_dimension_numbers<[1], [0], [0], [1], [0, 0, 1, 1], [], []>} : vector<8x128xf32>, vector<128x8xf32>, vector<8x8xf32> -> vector<8x8xf32>
    %c0_17 = arith.constant 0 : index
    %c0_18 = arith.constant 0 : index
    %23 = vector.load %arg7[%c0_17, %c0_18] : memref<1x8xf32, #tpu.memory_space<vmem>>, vector<1x8xf32>
    %24 = vector.broadcast %23 : vector<1x8xf32> to vector<8x8xf32>
    %25 = arith.addf %22, %24 : vector<8x8xf32>
    %c0_19 = arith.constant 0 : index
    %c0_20 = arith.constant 0 : index
    %26 = vector.load %arg8[%c0_19, %c0_20] : memref<8x8xf32, #tpu.memory_space<vmem>>, vector<8x8xf32>
    tpu.vector_store %arg8[%c0_19, %c0_20], %25 {strides = array<i32>} : memref<8x8xf32, #tpu.memory_space<vmem>>, vector<8x8xf32>,
    return
  }
  func.func @transform_0(%arg0: i32) -> (i32, i32) {
    %c0_i32 = arith.constant 0 : i32
    %c0_i32_0 = arith.constant 0 : i32
    return %arg0, %c0_i32 : i32, i32
  }
  func.func @transform_1(%arg0: i32) -> (i32, i32) {
    %c0_i32 = arith.constant 0 : i32
    %c0_i32_0 = arith.constant 0 : i32
    %c0_i32_1 = arith.constant 0 : i32
    return %c0_i32, %c0_i32_0 : i32, i32
  }
  func.func @transform_2(%arg0: i32) -> (i32, i32) {
    %c0_i32 = arith.constant 0 : i32
    %c0_i32_0 = arith.constant 0 : i32
    %c0_i32_1 = arith.constant 0 : i32
    return %c0_i32, %c0_i32_0 : i32, i32
  }
  func.func @transform_3(%arg0: i32) -> (i32, i32) {
    %c0_i32 = arith.constant 0 : i32
    %c0_i32_0 = arith.constant 0 : i32
    %c0_i32_1 = arith.constant 0 : i32
    return %c0_i32, %c0_i32_0 : i32, i32
  }
  func.func @transform_4(%arg0: i32) -> (i32, i32) {
    %c0_i32 = arith.constant 0 : i32
    %c0_i32_0 = arith.constant 0 : i32
    %c0_i32_1 = arith.constant 0 : i32
    return %c0_i32, %c0_i32_0 : i32, i32
  }
  func.func @transform_5(%arg0: i32) -> (i32, i32) {
    %c0_i32 = arith.constant 0 : i32
    %c0_i32_0 = arith.constant 0 : i32
    %c0_i32_1 = arith.constant 0 : i32
    return %c0_i32, %c0_i32_0 : i32, i32
  }
  func.func @transform_6(%arg0: i32) -> (i32, i32) {
    %c0_i32 = arith.constant 0 : i32
    %c0_i32_0 = arith.constant 0 : i32
    %c0_i32_1 = arith.constant 0 : i32
    return %c0_i32, %c0_i32_0 : i32, i32
  }
  func.func @transform_7(%arg0: i32) -> (i32, i32) {
    %c0_i32 = arith.constant 0 : i32
    %c0_i32_0 = arith.constant 0 : i32
    return %arg0, %c0_i32 : i32, i32
  }
}

</mosaic_0001>

<llo_original>
// kernel: simple_classifier_forward.1
$region0: #{simple_classifier_forward.1}
  #allocation0 [shape = 'u32[]', space=smem, size = 0x4, offset = 0x4, fixed_abs, tag = 'smem constant byte address 0x4 - core index']
  #allocation1 [shape = 'u32[72,128]{1,0:T(1,128)}', space=vmem, size = 0x9000, scoped, tag = 'internal scratch']
  %s0 = inlined_call_operand.vmem [shape: f32[8,32], index: 0, kind: input, shape index: {}]
  %s1 = inlined_call_operand.hbm [shape: f32[32,128], index: 1, kind: input, shape index: {}]
  %s2 = inlined_call_operand.vmem [shape: f32[1,128], index: 2, kind: input, shape index: {}]
  %s3 = inlined_call_operand.vmem [shape: f32[128,128], index: 3, kind: input, shape index: {}]
  %s4 = inlined_call_operand.vmem [shape: f32[1,128], index: 4, kind: input, shape index: {}]
  %s5 = inlined_call_operand.vmem [shape: f32[128,8], index: 5, kind: input, shape index: {}]
  %s6 = inlined_call_operand.vmem [shape: f32[1,8], index: 6, kind: input, shape index: {}]
  %s7 = inlined_call_operand.hbm [shape: f32[8,8], index: 7, kind: output, shape index: {}]
  %s8 = sld [smem:[#allocation0]]
  $region42: #{simple_classifier_forward.1} parent=0
    _
  %s10 = ssub.s32 1, %s8
  %s11 = scalar_select 0, %s10, %s8
  $region1: #{simple_classifier_forward.1} parent=0
    #allocation2 [shape = 'u8[16384]{0}', space=vmem, size = 0x4000, scoped, tag = 'input window, operand 1, single buffered']
    #allocation3 [shape = 's32[1]{0}', space=sflag, size = 0x4, scoped, tag = 'scoped memory for simple_classifier_forward.1']
    #allocation4 [shape = 's32[1]{0}', space=sflag, size = 0x4, scoped, tag = 'scoped memory for simple_classifier_forward.1']
    #allocation5 [shape = 'u8[4096]{0}', space=vmem, size = 0x1000, scoped, tag = 'output window, operand 0, single buffered']
    %12 = vsyncpa [#allocation3], 0
    %13 = vsyncpa [#allocation4], 0
    // Predicated region
    $region2: #{simple_classifier_forward.1} parent=1 // pred_check
      _
    $region3: #{simple_classifier_forward.1} parent=1 // pred_check_branch
      %15 = sbr.rel (0) target = $region5
    $region4: #{simple_classifier_forward.1} parent=1 // pred_region
      _
    $region5: #{simple_classifier_forward.1} parent=1 // pred_fallthru
      _
    // Predicated region
    $region6: #{simple_classifier_forward.1} parent=1 // pred_check
      _
    $region7: #{simple_classifier_forward.1} parent=1 // pred_check_branch
      %17 = sbr.rel (0) target = $region9
    $region8: #{simple_classifier_forward.1} parent=1 // pred_region
      %19 = vsyncadd [#allocation3], 0
      %s20 = sshll.u32 %s1, 4
      %s21 = int_to_ptr.hbm [resolvable:$true] %s20
      %s22 = sshll.u32 [#allocation2], 4
      %s23 = int_to_ptr.vmem [resolvable:$true] %s22
      %28 = dma.hbm_to_vmem [thread:$0]  %s21, 512, %s23, [#allocation3], 128, 128, 8
    $region9: #{simple_classifier_forward.1} parent=1 // pred_fallthru
      _
    // Predicated region
    $region10: #{simple_classifier_forward.1} parent=1 // pred_check
      _
    $region11: #{simple_classifier_forward.1} parent=1 // pred_check_branch
      %30 = sbr.rel (0) target = $region13
    $region12: #{simple_classifier_forward.1} parent=1 // pred_region
      _
    $region13: #{simple_classifier_forward.1} parent=1 // pred_fallthru
      _
    // Predicated region
    $region14: #{simple_classifier_forward.1} parent=1 // pred_check
      _
    $region15: #{simple_classifier_forward.1} parent=1 // pred_check_branch
      %32 = sbr.rel (0) target = $region17
    $region16: #{simple_classifier_forward.1} parent=1 // pred_region
      _
    $region17: #{simple_classifier_forward.1} parent=1 // pred_fallthru
      _
    // Predicated region
    $region18: #{simple_classifier_forward.1} parent=1 // pred_check
      _
    $region19: #{simple_classifier_forward.1} parent=1 // pred_check_branch
      %34 = sbr.rel (0) target = $region21
    $region20: #{simple_classifier_forward.1} parent=1 // pred_region
      _
    $region21: #{simple_classifier_forward.1} parent=1 // pred_fallthru
      _
    // Predicated region
    $region22: #{simple_classifier_forward.1} parent=1 // pred_check
      _
    $region23: #{simple_classifier_forward.1} parent=1 // pred_check_branch
      %36 = sbr.rel (0) target = $region25
    $region24: #{simple_classifier_forward.1} parent=1 // pred_region
      _
    $region25: #{simple_classifier_forward.1} parent=1 // pred_fallthru
      _
    // Predicated region
    $region26: #{simple_classifier_forward.1} parent=1 // pred_check
      _
    $region27: #{simple_classifier_forward.1} parent=1 // pred_check_branch
      %38 = sbr.rel (0) target = $region29
    $region28: #{simple_classifier_forward.1} parent=1 // pred_region
      _
    $region29: #{simple_classifier_forward.1} parent=1 // pred_fallthru
      _
    // Predicated region
    $region30: #{simple_classifier_forward.1} parent=1 // pred_check
      _
    $region31: #{simple_classifier_forward.1} parent=1 // pred_check_branch
      %40 = sbr.rel (0) target = $region33
    $region32: #{simple_classifier_forward.1} parent=1 // pred_region
      %42 = dma.done [#allocation3], 512
    $region33: #{simple_classifier_forward.1} parent=1 // pred_fallthru
      _
    %v43 = vld [vmem:[%s0] sm:$0xff]
    %v44 = vld [vmem:[#allocation2] sm:$0xff]
    %v45 = vld [vmem:[#allocation2 + $0x8] sm:$0xff]
    %v46 = vld [vmem:[#allocation2 + $0x10] sm:$0xff]
    %v47 = vld [vmem:[#allocation2 + $0x18] sm:$0xff]
    %v48 = vld [vmem:[%s2] sm:$0x1]
    %v50 = vperm.slane %v48, 0
    %vm52 = vcmask 261120
    %v54 = vsel %vm52, %v43, 0
    %56 = vmatpush.msra.mxu0 0.0
    %57 = vmatpush.msra.mxu0 0.0
    %58 = vmatpush.msra.mxu0 0.0
    %59 = vmatpush.msra.mxu0 0.0
    %60 = vmatpush.msra.mxu0 0.0
    %61 = vmatpush.msra.mxu0 0.0
    %62 = vmatpush.msra.mxu0 0.0
    %63 = vmatpush.msra.mxu0 0.0
    %64 = vmatpush.msra.mxu0 0.0
    %65 = vmatpush.msra.mxu0 0.0
    %66 = vmatpush.msra.mxu0 0.0
    %67 = vmatpush.msra.mxu0 0.0
    %68 = vmatpush.msra.mxu0 %v47
    %69 = vmatpush.msra.mxu0 %v46
    %70 = vmatpush.msra.mxu0 %v45
    %71 = vmatpush.msra.mxu0 %v44
    %72 = vmatmul.f32.gmra.mxu0 %v54
    %v73 = vpop.f32.mrf.mxu0
    %v74 = vadd.f32 %v50, %v73
    %75 = vdwg.mxu0
    %vm76 = vcmp.ge.f32.partialorder %v74, 0.0
    %v77 = vmul.f32 %v74, 0.01
    %v78 = vsel %vm76, %v74, %v77
    %v79 = vld [vmem:[%s3] sm:$0xff]
    %v80 = vld [vmem:[%s3 + $0x8] sm:$0xff]
    %v81 = vld [vmem:[%s3 + $0x10] sm:$0xff]
    %v82 = vld [vmem:[%s3 + $0x18] sm:$0xff]
    %v83 = vld [vmem:[%s3 + $0x20] sm:$0xff]
    %v84 = vld [vmem:[%s3 + $0x28] sm:$0xff]
    %v85 = vld [vmem:[%s3 + $0x30] sm:$0xff]
    %v86 = vld [vmem:[%s3 + $0x38] sm:$0xff]
    %v87 = vld [vmem:[%s3 + $0x40] sm:$0xff]
    %v88 = vld [vmem:[%s3 + $0x48] sm:$0xff]
    %v89 = vld [vmem:[%s3 + $0x50] sm:$0xff]
    %v90 = vld [vmem:[%s3 + $0x58] sm:$0xff]
    %v91 = vld [vmem:[%s3 + $0x60] sm:$0xff]
    %v92 = vld [vmem:[%s3 + $0x68] sm:$0xff]
    %v93 = vld [vmem:[%s3 + $0x70] sm:$0xff]
    %v94 = vld [vmem:[%s3 + $0x78] sm:$0xff]
    %v95 = vld [vmem:[%s4] sm:$0x1]
    %v97 = vperm.slane %v95, 0
    %99 = vmatpush.msra.mxu0 %v94
    %100 = vmatpush.msra.mxu0 %v93
    %101 = vmatpush.msra.mxu0 %v92
    %102 = vmatpush.msra.mxu0 %v91
    %103 = vmatpush.msra.mxu0 %v90
    %104 = vmatpush.msra.mxu0 %v89
    %105 = vmatpush.msra.mxu0 %v88
    %106 = vmatpush.msra.mxu0 %v87
    %107 = vmatpush.msra.mxu0 %v86
    %108 = vmatpush.msra.mxu0 %v85
    %109 = vmatpush.msra.mxu0 %v84
    %110 = vmatpush.msra.mxu0 %v83
    %111 = vmatpush.msra.mxu0 %v82
    %112 = vmatpush.msra.mxu0 %v81
    %113 = vmatpush.msra.mxu0 %v80
    %114 = vmatpush.msra.mxu0 %v79
    %115 = vmatmul.f32.gmra.mxu0 %v78
    %v116 = vpop.f32.mrf.mxu0
    %v117 = vadd.f32 %v97, %v116
    %118 = vdwg.mxu0
    %vm119 = vcmp.ge.f32.partialorder %v117, 0.0
    %v120 = vmul.f32 %v117, 0.01
    %v121 = vsel %vm119, %v117, %v120
    %v122 = vld [vmem:[%s5] sm:$0xff]
    %v123 = vld [vmem:[%s5 + $0x8] sm:$0xff]
    %v124 = vld [vmem:[%s5 + $0x10] sm:$0xff]
    %v125 = vld [vmem:[%s5 + $0x18] sm:$0xff]
    %v126 = vld [vmem:[%s5 + $0x20] sm:$0xff]
    %v127 = vld [vmem:[%s5 + $0x28] sm:$0xff]
    %v128 = vld [vmem:[%s5 + $0x30] sm:$0xff]
    %v129 = vld [vmem:[%s5 + $0x38] sm:$0xff]
    %v130 = vld [vmem:[%s5 + $0x40] sm:$0xff]
    %v131 = vld [vmem:[%s5 + $0x48] sm:$0xff]
    %v132 = vld [vmem:[%s5 + $0x50] sm:$0xff]
    %v133 = vld [vmem:[%s5 + $0x58] sm:$0xff]
    %v134 = vld [vmem:[%s5 + $0x60] sm:$0xff]
    %v135 = vld [vmem:[%s5 + $0x68] sm:$0xff]
    %v136 = vld [vmem:[%s5 + $0x70] sm:$0xff]
    %v137 = vld [vmem:[%s5 + $0x78] sm:$0xff]
    %v138 = vld [vmem:[%s6] sm:$0x1]
    %v140 = vperm.slane %v138, 0
    %142 = vmatpush.msra.mxu0 %v137
    %143 = vmatpush.msra.mxu0 %v136
    %144 = vmatpush.msra.mxu0 %v135
    %145 = vmatpush.msra.mxu0 %v134
    %146 = vmatpush.msra.mxu0 %v133
    %147 = vmatpush.msra.mxu0 %v132
    %148 = vmatpush.msra.mxu0 %v131
    %149 = vmatpush.msra.mxu0 %v130
    %150 = vmatpush.msra.mxu0 %v129
    %151 = vmatpush.msra.mxu0 %v128
    %152 = vmatpush.msra.mxu0 %v127
    %153 = vmatpush.msra.mxu0 %v126
    %154 = vmatpush.msra.mxu0 %v125
    %155 = vmatpush.msra.mxu0 %v124
    %156 = vmatpush.msra.mxu0 %v123
    %157 = vmatpush.msra.mxu0 %v122
    %158 = vmatmul.f32.gmra.mxu0 %v121
    %v159 = vpop.f32.mrf.mxu0
    %v160 = vadd.f32 %v140, %v159
    %161 = vdwg.mxu0
    %vm162 = vcmask 64512
    %163 = vst.msk [vmem:[#allocation5] sm:$0xff] %vm162, %v160
    // Predicated region
    $region34: #{simple_classifier_forward.1} parent=1 // pred_check
      _
    $region35: #{simple_classifier_forward.1} parent=1 // pred_check_branch
      %165 = sbr.rel (0) target = $region37
    $region36: #{simple_classifier_forward.1} parent=1 // pred_region
      %167 = vsyncadd [#allocation4], 0
      %s169 = sshll.u32 [#allocation5], 4
      %s170 = int_to_ptr.vmem [resolvable:$true] %s169
      %s171 = sshll.u32 %s7, 4
      %s172 = int_to_ptr.hbm [resolvable:$true] %s171
      %174 = dma.vmem_to_hbm [thread:$0]  %s170, 128, %s172, [#allocation4]
    $region37: #{simple_classifier_forward.1} parent=1 // pred_fallthru
      _
    // Predicated region
    $region38: #{simple_classifier_forward.1} parent=1 // pred_check
      _
    $region39: #{simple_classifier_forward.1} parent=1 // pred_check_branch
      %176 = sbr.rel (0) target = $region41
    $region40: #{simple_classifier_forward.1} parent=1 // pred_region
      %178 = dma.done [#allocation4], 128
    $region41: #{simple_classifier_forward.1} parent=1 // pred_fallthru
      _
    %179 = vsyncpa [#allocation3], 1
    %180 = vsyncpa [#allocation4], 1

</llo_original>
